<compile_context>
chip_gen: v6e
topology: v6e:2x2x1
jax: 0.10.0
libtpu: 0.0.40
codegen_flags: <defaults>
</compile_context>

<pallas_src>
import jax
import jax.numpy as jnp
from jax import lax
from jax.experimental import pallas as pl
from jax.experimental.pallas import tpu as pltpu

N_CLASSES = 4
EPS = 1e-8


def _cdiv(a, b):
    return -(-a // b)


def _round_up(a, b):
    return _cdiv(a, b) * b


def _num_tensorcores():
    """2 TensorCores per chip on v7x, 1 on v5e/v6e.  Conservative fallback: 1."""
    try:
        kind = jax.devices()[0].device_kind.lower()
        if "v7" in kind:
            return 2
    except Exception:
        pass
    return 1


def _reference_counts(pred, gt, n_classes=N_CLASSES):
    """Pure-JAX reference mirroring the PyTorch forward() counts (also the tiny-map path)."""
    tps, tns, fns, fps = [], [], [], []
    for i in range(1, n_classes):
        p = pred == i
        g = gt == i
        tps.append(jnp.sum((p & g).astype(jnp.int32)))
        tns.append(jnp.sum((~p & ~g).astype(jnp.int32)))
        fns.append(jnp.sum((~p & g).astype(jnp.int32)))
        fps.append(jnp.sum((p & ~g).astype(jnp.int32)))
    return jnp.stack([jnp.stack(tps), jnp.stack(tns),
                      jnp.stack(fns), jnp.stack(fps)], axis=1)


def _make_counts_kernel(n_classes, tile_h, W, chunk_rows, nsplits, tiles_per_split,
                        n_tiles, H, needs_mask, out_rows):
    n_fg = n_classes - 1

    # In-kernel row-chunking: n_full chunks of CH rows (CH a multiple of 8 so dynamic
    # sublane offsets stay aligned) plus one statically-sliced remainder chunk.
    if tile_h >= 8:
        CH = max(8, (min(chunk_rows, tile_h) // 8) * 8)
    else:
        CH = tile_h
    n_full = tile_h // CH
    rem = tile_h - n_full * CH

    def kernel(pred_ref, gt_ref, out_ref):
        s = pl.program_id(0)
        t = pl.program_id(1)

        @pl.when(t == 0)
        def _init():
            out_ref[...] = jnp.zeros_like(out_ref)

        # Intended (unclamped) global row of this tile's first row.  The index_map
        # clamps fully-out-of-range tiles onto the last real tile; masking below uses
        # the *intended* rows so duplicated data contributes nothing.
        tile_row0 = (t * nsplits + s) * tile_h

        def chunk_sums(p, g, chunk_row0):
            # p, g: (ch, W) label chunks in their native dtype (no widened copies).
            if needs_mask:
                row = chunk_row0 + lax.broadcasted_iota(jnp.int32, p.shape, 0)
                ok = row < H
                # class 0 (background) is never counted, so 0 is a safe fill value.
                p = jnp.where(ok, p, jnp.zeros_like(p))
                g = jnp.where(ok, g, jnp.zeros_like(g))
            parts = []
            for c in range(1, n_classes):
                p_m = p == c
                g_m = g == c
                tp_m = jnp.logical_and(p_m, g_m)
                # Only the (1, W) sublane partial sums are widened to int32.
                parts.append(jnp.sum(p_m, axis=0, dtype=jnp.int32, keepdims=True))
                parts.append(jnp.sum(g_m, axis=0, dtype=jnp.int32, keepdims=True))
                parts.append(jnp.sum(tp_m, axis=0, dtype=jnp.int32, keepdims=True))
            return tuple(parts)  # 3*n_fg arrays of shape (1, W) int32

        zero_row = jnp.zeros((1, W), jnp.int32)
        acc = tuple(zero_row for _ in range(3 * n_fg))

        def body(ci, acc):
            r0 = ci * CH
            if CH % 8 == 0:
                r0 = pl.multiple_of(r0, 8)
            p = pred_ref[pl.ds(r0, CH), :]
            g = gt_ref[pl.ds(r0, CH), :]
            part = chunk_sums(p, g, tile_row0 + ci * CH)
            return tuple(a + b for a, b in zip(acc, part))

        acc = lax.fori_loop(0, n_full, body, acc, unroll=(n_full <= 8))

        if rem > 0:
            p = pred_ref[pl.ds(n_full * CH, rem), :]
            g = gt_ref[pl.ds(n_full * CH, rem), :]
            part = chunk_sums(p, g, tile_row0 + n_full * CH)
            acc = tuple(a + b for a, b in zip(acc, part))

        upd = jnp.concatenate(list(acc), axis=0)  # (3*n_fg, W) int32
        if out_rows > 3 * n_fg:
            upd = jnp.concatenate(
                [upd, jnp.zeros((out_rows - 3 * n_fg, W), jnp.int32)], axis=0)
        # One full aligned accumulate-store per grid step; the output block is the
        # cross-tile accumulator (its block index is constant along the t axis).
        out_ref[...] = out_ref[...] + upd

    return kernel


def per_class_counts(pred, gt, n_classes=N_CLASSES, *, nsplits=None, chunk_rows=None,
                     max_tile_bytes=4 * 1024 * 1024, jax_fast_path_below=0):
    """Exact int32 (n_classes-1, 4) matrix [TP, TN, FN, FP] for classes 1..n_classes-1."""
    assert n_classes >= 2
    assert pred.shape == gt.shape

    # Flatten to a 2-D (rows, cols) plane; the last dim maps to lanes.  No cast, no pad.
    if pred.ndim == 1:
        pred2, gt2 = pred[None, :], gt[None, :]
    elif pred.ndim == 2:
        pred2, gt2 = pred, gt
    else:
        pred2 = pred.reshape(-1, pred.shape[-1])
        gt2 = gt.reshape(-1, gt.shape[-1])
    H, W = pred2.shape
    total = H * W
    assert total < 2 ** 31  # count arithmetic is exact int32

    if total < jax_fast_path_below:
        # pallas_call fixed overhead dwarfs the work for tiny maps.
        return _reference_counts(pred, gt, n_classes)

    if nsplits is None:
        nsplits = _num_tensorcores()
    nsplits = max(1, min(int(nsplits), _cdiv(H, 8)))

    itemsize = max(pred2.dtype.itemsize, gt2.dtype.itemsize)
    row_bytes = W * itemsize
    cap_rows = max(8, max_tile_bytes // row_bytes)

    if chunk_rows is None:
        # ~8K elements per chunk keeps the per-chunk masks (near-)vreg-resident.
        chunk_rows = max(8, min(512, ((8192 // max(W, 1)) // 8) * 8))
    chunk_rows = max(8, int(chunk_rows))

    if nsplits == 1 and H <= cap_rows:
        tile_h = H                       # exact single tile (any H, any W)
    else:
        tile_h = min(_round_up(_cdiv(H, nsplits), 8), max(8, (cap_rows // 8) * 8))
    n_tiles = _cdiv(H, tile_h)
    tiles_per_split = _cdiv(n_tiles, nsplits)
    needs_mask = nsplits * tiles_per_split * tile_h != H

    n_fg = n_classes - 1
    out_rows = _round_up(3 * n_fg, 8)

    kernel = _make_counts_kernel(n_classes, tile_h, W, chunk_rows, nsplits,
                                 tiles_per_split, n_tiles, H, needs_mask, out_rows)

    def in_map(s, t):
        # Interleaved tile assignment (splits balanced to within one tile); indices past
        # the last real tile are clamped onto it and neutralized by the in-kernel mask.
        return (jnp.minimum(t * nsplits + s, n_tiles - 1), 0)

    raw = pl.pallas_call(
        kernel,
        out_shape=jax.ShapeDtypeStruct((nsplits, out_rows, W), jnp.int32),
        grid_spec=pltpu.PrefetchScalarGridSpec(
            num_scalar_prefetch=0,
            grid=(nsplits, tiles_per_split),
            in_specs=[pl.BlockSpec((tile_h, W), in_map),
                      pl.BlockSpec((tile_h, W), in_map)],
            out_specs=pl.BlockSpec((None, out_rows, W), lambda s, t: (s, 0, 0)),
        ),
        compiler_params=pltpu.CompilerParams(
            dimension_semantics=("parallel", "arbitrary"),
            vmem_limit_bytes=32 * 1024 * 1024,
        ),
        cost_estimate=pl.CostEstimate(
            flops=int(total) * 9 * n_fg,
            transcendentals=0,
            bytes_accessed=int(total) * (pred2.dtype.itemsize + gt2.dtype.itemsize)
                           + nsplits * out_rows * W * 4,
        ),
    )(pred2, gt2)

    sums = jnp.sum(raw, axis=(0, 2))           # combine split slabs + lane partial sums
    per = sums[:3 * n_fg].reshape(n_fg, 3)     # rows: class; cols: [sum(pred==c), sum(gt==c), TP]
    s_p, s_g, tp = per[:, 0], per[:, 1], per[:, 2]
    fn = s_g - tp
    fp = s_p - tp
    tn = jnp.int32(total) - s_p - s_g + tp     # true pixel count -> masking is exact
    return jnp.stack([tp, tn, fn, fp], axis=1)


def metrics_per_class(pred, gt, n_classes=N_CLASSES, **kwargs):
    """Reproduces MetricsPerClass.forward() for one update.

    The FN/FP zeroing branches and the isnan(dice) guard in the PyTorch code are no-ops
    given FN = sum(~pred_i & gt_i), FP = sum(pred_i & ~gt_i) and the epsilon.  `valid`
    marks classes the PyTorch loop would not skip (pred_i.sum()==0 and gt_i.sum()==0 ->
    skipped).
    """
    counts = per_class_counts(pred, gt, n_classes, **kwargs)
    c = counts.astype(jnp.float32)
    tp, tn, fn, fp = c[:, 0], c[:, 1], c[:, 2], c[:, 3]

    valid = (tp + fn + fp) > 0
    recall = tp / (tp + fn + EPS)
    accuarcy = (tp + tn) / (tp + tn + fp + fn + EPS)
    precision = tp / (tp + fp + EPS)
    dice = 2.0 * tp / (2.0 * tp + fp + fn + EPS)
    iou = tp / (tp + fn + fp + EPS)
    return {
        "dice": dice, "precision": precision, "recall": recall,
        "accuarcy": accuarcy, "iou": iou, "valid": valid,
        "counts": counts,
    }


if __name__ == "__main__":
    key = jax.random.PRNGKey(0)
    k1, k2, k3, k4, k5, k6 = jax.random.split(key, 6)

    # Case 1: module-sized demo (single 16x16 label-map pair) -> exact full-array tile.
    pred1 = jax.random.randint(k1, (16, 16), 0, N_CLASSES, dtype=jnp.int32)
    gt1 = jax.random.randint(k2, (16, 16), 0, N_CLASSES, dtype=jnp.int32)
    m = metrics_per_class(pred1, gt1, N_CLASSES)
    jax.block_until_ready(m["dice"])
    ref1 = _reference_counts(pred1, gt1, N_CLASSES)
    assert jnp.array_equal(m["counts"], ref1), (m["counts"], ref1)

    # Case 2: odd, non-128-aligned spatial size (37x53).
    pred2 = jax.random.randint(k3, (37, 53), 0, N_CLASSES, dtype=jnp.int32)
    gt2 = jax.random.randint(k4, (37, 53), 0, N_CLASSES, dtype=jnp.int32)
    c2 = per_class_counts(pred2, gt2, N_CLASSES)
    jax.block_until_ready(c2)
    ref2 = _reference_counts(pred2, gt2, N_CLASSES)
    assert jnp.array_equal(c2, ref2), (c2, ref2)

    # Case 3: stress the general path: 2 row-splits, capped tiles, chunked inner loop,
    # a ragged last tile and a fully-out-of-range (clamped + masked) tile.
    pred3 = jax.random.randint(k5, (450, 160), 0, N_CLASSES, dtype=jnp.int32)
    gt3 = jax.random.randint(k6, (450, 160), 0, N_CLASSES, dtype=jnp.int32)
    c3 = per_class_counts(pred3, gt3, N_CLASSES, nsplits=2, chunk_rows=64,
                          max_tile_bytes=64 * 1024)
    jax.block_until_ready(c3)
    ref3 = _reference_counts(pred3, gt3, N_CLASSES)
    assert jnp.array_equal(c3, ref3), (c3, ref3)

    # TODO(synk): the PyTorch module also accumulates metrics into Python lists across
    # forward() calls (self.class_metrics_dict / get_mean_values); that host-side
    # bookkeeping stays outside the kernel.
    print("KERNEL_OK")
</pallas_src>

<mosaic_0001>
module attributes {stable_mosaic.version = 11 : i64} {
  func.func @kernel(%arg0: i32, %arg1: i32, %arg2: memref<16x16xi32, #tpu.memory_space<vmem>>, %arg3: memref<16x16xi32, #tpu.memory_space<vmem>>, %arg4: memref<1x16x16xi32, #tpu.memory_space<vmem>>) attributes {dimension_semantics = [#tpu.dimension_semantics<parallel>, #tpu.dimension_semantics<arbitrary>], iteration_bounds = array<i64: 1, 1>, scalar_prefetch = 0 : i64, scratch_operands = 0 : i64, tpu.core_type = #tpu.core_type<tc>, window_params = [{transform_indices = @transform_0, window_bounds = array<i64: 16, 16>}, {transform_indices = @transform_1, window_bounds = array<i64: 16, 16>}, {transform_indices = @transform_2, window_bounds = array<i64: 1, 16, 16>}]} {
    %c0_i32 = arith.constant 0 : i32
    %0 = arith.cmpi eq, %arg1, %c0_i32 : i32
    %1 = arith.extui %0 : i1 to i32
    %c0_i32_0 = arith.constant 0 : i32
    %2 = arith.cmpi ne, %1, %c0_i32_0 : i32
    scf.if %2 {
      %c0_i32_23 = arith.constant 0 : i32
      %70 = vector.broadcast %c0_i32_23 : i32 to vector<16x16xi32>
      %c0_24 = arith.constant 0 : index
      %c0_25 = arith.constant 0 : index
      %c0_26 = arith.constant 0 : index
      %71 = vector.load %arg4[%c0_24, %c0_25, %c0_26] : memref<1x16x16xi32, #tpu.memory_space<vmem>>, vector<1x16x16xi32>
      %72 = vector.shape_cast %71 : vector<1x16x16xi32> to vector<16x16xi32>
      %73 = vector.shape_cast %70 : vector<16x16xi32> to vector<1x16x16xi32>
      tpu.vector_store %arg4[%c0_24, %c0_25, %c0_26], %73 {strides = array<i32>} : memref<1x16x16xi32, #tpu.memory_space<vmem>>, vector<1x16x16xi32>,
    } else {
    }
    %c0_i32_1 = arith.constant 0 : i32
    %3 = vector.broadcast %c0_i32_1 : i32 to vector<1x16xi32>
    %c0_i32_2 = arith.constant 0 : i32
    %c16_i32 = arith.constant 16 : i32
    %4 = arith.muli %c0_i32_2, %c16_i32 : i32
    %5 = tpu.assume_multiple %4, 8 : i32
    %6 = arith.index_cast %5 : i32 to index
    %c0 = arith.constant 0 : index
    %7 = vector.load %arg2[%6, %c0] : memref<16x16xi32, #tpu.memory_space<vmem>>, vector<16x16xi32>
    %8 = arith.index_cast %5 : i32 to index
    %c0_3 = arith.constant 0 : index
    %9 = vector.load %arg3[%8, %c0_3] : memref<16x16xi32, #tpu.memory_space<vmem>>, vector<16x16xi32>
    %c1_i32 = arith.constant 1 : i32
    %10 = vector.broadcast %c1_i32 : i32 to vector<16x16xi32>
    %11 = arith.cmpi eq, %7, %10 : vector<16x16xi32>
    %c1_i32_4 = arith.constant 1 : i32
    %12 = vector.broadcast %c1_i32_4 : i32 to vector<16x16xi32>
    %13 = arith.cmpi eq, %9, %12 : vector<16x16xi32>
    %14 = arith.andi %11, %13 : vector<16x16xi1>
    %15 = arith.extui %11 : vector<16x16xi1> to vector<16x16xi32>
    %cst = arith.constant dense<0> : vector<16xi32>
    %16 = vector.multi_reduction <add>, %15, %cst [0] : vector<16x16xi32> to vector<16xi32>
    %17 = vector.shape_cast %16 : vector<16xi32> to vector<1x16xi32>
    %18 = arith.extui %13 : vector<16x16xi1> to vector<16x16xi32>
    %cst_5 = arith.constant dense<0> : vector<16xi32>
    %19 = vector.multi_reduction <add>, %18, %cst_5 [0] : vector<16x16xi32> to vector<16xi32>
    %20 = vector.shape_cast %19 : vector<16xi32> to vector<1x16xi32>
    %21 = arith.extui %14 : vector<16x16xi1> to vector<16x16xi32>
    %cst_6 = arith.constant dense<0> : vector<16xi32>
    %22 = vector.multi_reduction <add>, %21, %cst_6 [0] : vector<16x16xi32> to vector<16xi32>
    %23 = vector.shape_cast %22 : vector<16xi32> to vector<1x16xi32>
    %c2_i32 = arith.constant 2 : i32
    %24 = vector.broadcast %c2_i32 : i32 to vector<16x16xi32>
    %25 = arith.cmpi eq, %7, %24 : vector<16x16xi32>
    %c2_i32_7 = arith.constant 2 : i32
    %26 = vector.broadcast %c2_i32_7 : i32 to vector<16x16xi32>
    %27 = arith.cmpi eq, %9, %26 : vector<16x16xi32>
    %28 = arith.andi %25, %27 : vector<16x16xi1>
    %29 = arith.extui %25 : vector<16x16xi1> to vector<16x16xi32>
    %cst_8 = arith.constant dense<0> : vector<16xi32>
    %30 = vector.multi_reduction <add>, %29, %cst_8 [0] : vector<16x16xi32> to vector<16xi32>
    %31 = vector.shape_cast %30 : vector<16xi32> to vector<1x16xi32>
    %32 = arith.extui %27 : vector<16x16xi1> to vector<16x16xi32>
    %cst_9 = arith.constant dense<0> : vector<16xi32>
    %33 = vector.multi_reduction <add>, %32, %cst_9 [0] : vector<16x16xi32> to vector<16xi32>
    %34 = vector.shape_cast %33 : vector<16xi32> to vector<1x16xi32>
    %35 = arith.extui %28 : vector<16x16xi1> to vector<16x16xi32>
    %cst_10 = arith.constant dense<0> : vector<16xi32>
    %36 = vector.multi_reduction <add>, %35, %cst_10 [0] : vector<16x16xi32> to vector<16xi32>
    %37 = vector.shape_cast %36 : vector<16xi32> to vector<1x16xi32>
    %c3_i32 = arith.constant 3 : i32
    %38 = vector.broadcast %c3_i32 : i32 to vector<16x16xi32>
    %39 = arith.cmpi eq, %7, %38 : vector<16x16xi32>
    %c3_i32_11 = arith.constant 3 : i32
    %40 = vector.broadcast %c3_i32_11 : i32 to vector<16x16xi32>
    %41 = arith.cmpi eq, %9, %40 : vector<16x16xi32>
    %42 = arith.andi %39, %41 : vector<16x16xi1>
    %43 = arith.extui %39 : vector<16x16xi1> to vector<16x16xi32>
    %cst_12 = arith.constant dense<0> : vector<16xi32>
    %44 = vector.multi_reduction <add>, %43, %cst_12 [0] : vector<16x16xi32> to vector<16xi32>
    %45 = vector.shape_cast %44 : vector<16xi32> to vector<1x16xi32>
    %46 = arith.extui %41 : vector<16x16xi1> to vector<16x16xi32>
    %cst_13 = arith.constant dense<0> : vector<16xi32>
    %47 = vector.multi_reduction <add>, %46, %cst_13 [0] : vector<16x16xi32> to vector<16xi32>
    %48 = vector.shape_cast %47 : vector<16xi32> to vector<1x16xi32>
    %49 = arith.extui %42 : vector<16x16xi1> to vector<16x16xi32>
    %cst_14 = arith.constant dense<0> : vector<16xi32>
    %50 = vector.multi_reduction <add>, %49, %cst_14 [0] : vector<16x16xi32> to vector<16xi32>
    %51 = vector.shape_cast %50 : vector<16xi32> to vector<1x16xi32>
    %52 = arith.addi %3, %17 : vector<1x16xi32>
    %53 = arith.addi %3, %20 : vector<1x16xi32>
    %54 = arith.addi %3, %23 : vector<1x16xi32>
    %55 = arith.addi %3, %31 : vector<1x16xi32>
    %56 = arith.addi %3, %34 : vector<1x16xi32>
    %57 = arith.addi %3, %37 : vector<1x16xi32>
    %58 = arith.addi %3, %45 : vector<1x16xi32>
    %59 = arith.addi %3, %48 : vector<1x16xi32>
    %60 = arith.addi %3, %51 : vector<1x16xi32>
    %c1_i32_15 = arith.constant 1 : i32
    %61 = tpu.concatenate %52, %53, %54, %55, %56, %57, %58, %59, %60 in 0 : vector<1x16xi32>, vector<1x16xi32>, vector<1x16xi32>, vector<1x16xi32>, vector<1x16xi32>, vector<1x16xi32>, vector<1x16xi32>, vector<1x16xi32>, vector<1x16xi32> -> vector<9x16xi32>
    %c0_i32_16 = arith.constant 0 : i32
    %62 = vector.broadcast %c0_i32_16 : i32 to vector<7x16xi32>
    %63 = tpu.concatenate %61, %62 in 0 : vector<9x16xi32>, vector<7x16xi32> -> vector<16x16xi32>
    %c0_17 = arith.constant 0 : index
    %c0_18 = arith.constant 0 : index
    %c0_19 = arith.constant 0 : index
    %64 = vector.load %arg4[%c0_17, %c0_18, %c0_19] : memref<1x16x16xi32, #tpu.memory_space<vmem>>, vector<1x16x16xi32>
    %65 = vector.shape_cast %64 : vector<1x16x16xi32> to vector<16x16xi32>
    %66 = arith.addi %65, %63 : vector<16x16xi32>
    %c0_20 = arith.constant 0 : index
    %c0_21 = arith.constant 0 : index
    %c0_22 = arith.constant 0 : index
    %67 = vector.load %arg4[%c0_20, %c0_21, %c0_22] : memref<1x16x16xi32, #tpu.memory_space<vmem>>, vector<1x16x16xi32>
    %68 = vector.shape_cast %67 : vector<1x16x16xi32> to vector<16x16xi32>
    %69 = vector.shape_cast %66 : vector<16x16xi32> to vector<1x16x16xi32>
    tpu.vector_store %arg4[%c0_20, %c0_21, %c0_22], %69 {strides = array<i32>} : memref<1x16x16xi32, #tpu.memory_space<vmem>>, vector<1x16x16xi32>,
    return
  }
  func.func @transform_0(%arg0: i32, %arg1: i32) -> (i32, i32) {
    %c1_i32 = arith.constant 1 : i32
    %0 = arith.muli %arg1, %c1_i32 : i32
    %1 = arith.addi %0, %arg0 : i32
    %c0_i32 = arith.constant 0 : i32
    %2 = arith.minsi %1, %c0_i32 : i32
    %c0_i32_0 = arith.constant 0 : i32
    %c0_i32_1 = arith.constant 0 : i32
    return %2, %c0_i32_0 : i32, i32
  }
  func.func @transform_1(%arg0: i32, %arg1: i32) -> (i32, i32) {
    %c1_i32 = arith.constant 1 : i32
    %0 = arith.muli %arg1, %c1_i32 : i32
    %1 = arith.addi %0, %arg0 : i32
    %c0_i32 = arith.constant 0 : i32
    %2 = arith.minsi %1, %c0_i32 : i32
    %c0_i32_0 = arith.constant 0 : i32
    %c0_i32_1 = arith.constant 0 : i32
    return %2, %c0_i32_0 : i32, i32
  }
  func.func @transform_2(%arg0: i32, %arg1: i32) -> (i32, i32, i32) {
    %c0_i32 = arith.constant 0 : i32
    %c0_i32_0 = arith.constant 0 : i32
    %c0_i32_1 = arith.constant 0 : i32
    return %arg0, %c0_i32, %c0_i32_0 : i32, i32, i32
  }
}

</mosaic_0001>

<llo_original>
// kernel: tpu_custom_call.1
$region0: #{tpu_custom_call.1}
  #allocation0 [shape = 'u32[]', space=smem, size = 0x4, offset = 0x4, fixed_abs, tag = 'smem constant byte address 0x4 - core index']
  #allocation1 [shape = 'u32[144,128]{1,0:T(1,128)}', space=vmem, size = 0x12000, scoped, tag = 'internal scratch']
  %s0 = inlined_call_operand.hbm [shape: s32[16,16], index: 0, kind: input, shape index: {}]
  %s1 = inlined_call_operand.hbm [shape: s32[16,16], index: 1, kind: input, shape index: {}]
  %s2 = inlined_call_operand.hbm [shape: s32[1,16,16], index: 2, kind: output, shape index: {}]
  %s3 = sld [smem:[#allocation0]]
  $region30: #{tpu_custom_call.1} parent=0
    _
  %s5 = ssub.s32 1, %s3
  %s6 = scalar_select 0, %s5, %s3
  $region1: #{tpu_custom_call.1} parent=0
    #allocation2 [shape = 'u8[8192]{0}', space=vmem, size = 0x2000, scoped, tag = 'input window, operand 0, single buffered']
    #allocation3 [shape = 's32[1]{0}', space=sflag, size = 0x4, scoped, tag = 'scoped memory for tpu_custom_call.1']
    #allocation4 [shape = 's32[1]{0}', space=sflag, size = 0x4, scoped, tag = 'scoped memory for tpu_custom_call.1']
    #allocation5 [shape = 'u8[8192]{0}', space=vmem, size = 0x2000, scoped, tag = 'input window, operand 1, single buffered']
    #allocation6 [shape = 's32[1]{0}', space=sflag, size = 0x4, scoped, tag = 'scoped memory for tpu_custom_call.1']
    #allocation7 [shape = 'u8[8192]{0}', space=vmem, size = 0x2000, scoped, tag = 'output window, operand 0, single buffered']
    %7 = vsyncpa [#allocation3], 0
    %8 = vsyncpa [#allocation6], 0
    %9 = vsyncpa [#allocation4], 0
    // Predicated region
    $region2: #{tpu_custom_call.1} parent=1 // pred_check
      _
    $region3: #{tpu_custom_call.1} parent=1 // pred_check_branch
      %11 = sbr.rel (0) target = $region5
    $region4: #{tpu_custom_call.1} parent=1 // pred_region
      %s12 = sadd.s32 0, 0
      %p13 = scmp.lt.s32.totalorder %s12, 0
      %s14 = scalar_select %p13, %s12, 0
      %s15 = smul.u32 2, %s14
      %s17 = ssub.s32 256, 256
      %18 = vsyncadd [#allocation3], %s17
      %s19 = smul.addr %s15, 128
      %s20 = scalar_lea.hbm %s0, %s19
      %s21 = sshll.u32 [#allocation2], 4
      %s22 = int_to_ptr.vmem [resolvable:$true] %s21
      %27 = dma.hbm_to_vmem [thread:$0]  %s20, 256, %s22, [#allocation3], 128, 128, 8
    $region5: #{tpu_custom_call.1} parent=1 // pred_fallthru
      _
    // Predicated region
    $region6: #{tpu_custom_call.1} parent=1 // pred_check
      _
    $region7: #{tpu_custom_call.1} parent=1 // pred_check_branch
      %29 = sbr.rel (0) target = $region9
    $region8: #{tpu_custom_call.1} parent=1 // pred_region
      %s30 = sadd.s32 0, 0
      %p31 = scmp.lt.s32.totalorder %s30, 0
      %s32 = scalar_select %p31, %s30, 0
      %s33 = smul.u32 2, %s32
      %s35 = ssub.s32 256, 256
      %36 = vsyncadd [#allocation6], %s35
      %s37 = smul.addr %s33, 128
      %s38 = scalar_lea.hbm %s1, %s37
      %s39 = sshll.u32 [#allocation5], 4
      %s40 = int_to_ptr.vmem [resolvable:$true] %s39
      %45 = dma.hbm_to_vmem [thread:$0]  %s38, 256, %s40, [#allocation6], 128, 128, 8
    $region9: #{tpu_custom_call.1} parent=1 // pred_fallthru
      _
    // Predicated region
    $region10: #{tpu_custom_call.1} parent=1 // pred_check
      _
    $region11: #{tpu_custom_call.1} parent=1 // pred_check_branch
      %47 = sbr.rel (0) target = $region13
    $region12: #{tpu_custom_call.1} parent=1 // pred_region
      %48 = dma.done [#allocation3], 256
    $region13: #{tpu_custom_call.1} parent=1 // pred_fallthru
      _
    // Predicated region
    $region14: #{tpu_custom_call.1} parent=1 // pred_check
      _
    $region15: #{tpu_custom_call.1} parent=1 // pred_check_branch
      %50 = sbr.rel (0) target = $region17
    $region16: #{tpu_custom_call.1} parent=1 // pred_region
      %51 = dma.done [#allocation6], 256
    $region17: #{tpu_custom_call.1} parent=1 // pred_fallthru
      _
    %s52 = sadd.s32 0, 0
    %p53 = scmp.lt.s32.totalorder %s52, 0
    %s54 = scalar_select %p53, %s52, 0
    %s55 = smul.u32 2, %s54
    %s56 = sadd.s32 0, 0
    %p57 = scmp.lt.s32.totalorder %s56, 0
    %s58 = scalar_select %p57, %s56, 0
    %s59 = smul.u32 2, %s58
    %p60 = scmp.eq.s32.totalorder 0, 0
    // Predicated region
    $region18: #{tpu_custom_call.1} parent=1 // pred_check
      %p61 = pneg %p60
    $region19: #{tpu_custom_call.1} parent=1 // pred_check_branch
      %63 = sbr.rel (%p61) target = $region21
    $region20: #{tpu_custom_call.1} parent=1 // pred_region
      %vm64 = vcmask 130048
      %65 = vst.msk [vmem:[#allocation7] sm:$0xff] %vm64, 0
      %66 = vst.msk [vmem:[#allocation7 + $0x8] sm:$0xff] %vm64, 0
    $region21: #{tpu_custom_call.1} parent=1 // pred_fallthru
      _
    %v67 = vld [vmem:[#allocation2] sm:$0xff]
    %v68 = vld [vmem:[#allocation2 + $0x8] sm:$0xff]
    %v69 = vld [vmem:[#allocation5] sm:$0xff]
    %v70 = vld [vmem:[#allocation5 + $0x8] sm:$0xff]
    %vm71 = vcmp.eq.s32.totalorder %v67, 1
    %vm72 = vcmp.eq.s32.totalorder %v68, 1
    %vm73 = vcmp.eq.s32.totalorder %v69, 1
    %vm74 = vcmp.eq.s32.totalorder %v70, 1
    %vm75 = vmand %vm71, %vm73
    %vm76 = vmand %vm72, %vm74
    %v77 = vsel %vm71, 1, 0
    %v78 = vsel %vm72, 1, 0
    %vm79 = vcmask 130048
    %v80 = vsel %vm79, %v77, 0
    %v81 = vsel %vm79, %v78, 0
    %v82 = vadd.s32 %v80, %v81
    %v83 = vrot.slane %v82, 4
    %v84 = vadd.s32 %v82, %v83
    %v85 = vrot.slane %v84, 2
    %v86 = vadd.s32 %v84, %v85
    %v87 = vrot.slane %v86, 1
    %v88 = vadd.s32 %v86, %v87
    %v89 = vsel %vm73, 1, 0
    %v90 = vsel %vm74, 1, 0
    %v91 = vsel %vm79, %v89, 0
    %v92 = vsel %vm79, %v90, 0
    %v93 = vadd.s32 %v91, %v92
    %v94 = vrot.slane %v93, 4
    %v95 = vadd.s32 %v93, %v94
    %v96 = vrot.slane %v95, 2
    %v97 = vadd.s32 %v95, %v96
    %v98 = vrot.slane %v97, 1
    %v99 = vadd.s32 %v97, %v98
    %v100 = vsel %vm75, 1, 0
    %v101 = vsel %vm76, 1, 0
    %v102 = vsel %vm79, %v100, 0
    %v103 = vsel %vm79, %v101, 0
    %v104 = vadd.s32 %v102, %v103
    %v105 = vrot.slane %v104, 4
    %v106 = vadd.s32 %v104, %v105
    %v107 = vrot.slane %v106, 2
    %v108 = vadd.s32 %v106, %v107
    %v109 = vrot.slane %v108, 1
    %v110 = vadd.s32 %v108, %v109
    %vm111 = vcmp.eq.s32.totalorder %v67, 2
    %vm112 = vcmp.eq.s32.totalorder %v68, 2
    %vm113 = vcmp.eq.s32.totalorder %v69, 2
    %vm114 = vcmp.eq.s32.totalorder %v70, 2
    %vm115 = vmand %vm111, %vm113
    %vm116 = vmand %vm112, %vm114
    %v117 = vsel %vm111, 1, 0
    %v118 = vsel %vm112, 1, 0
    %v119 = vsel %vm79, %v117, 0
    %v120 = vsel %vm79, %v118, 0
    %v121 = vadd.s32 %v119, %v120
    %v122 = vrot.slane %v121, 4
    %v123 = vadd.s32 %v121, %v122
    %v124 = vrot.slane %v123, 2
    %v125 = vadd.s32 %v123, %v124
    %v126 = vrot.slane %v125, 1
    %v127 = vadd.s32 %v125, %v126
    %v128 = vsel %vm113, 1, 0
    %v129 = vsel %vm114, 1, 0
    %v130 = vsel %vm79, %v128, 0
    %v131 = vsel %vm79, %v129, 0
    %v132 = vadd.s32 %v130, %v131
    %v133 = vrot.slane %v132, 4
    %v134 = vadd.s32 %v132, %v133
    %v135 = vrot.slane %v134, 2
    %v136 = vadd.s32 %v134, %v135
    %v137 = vrot.slane %v136, 1
    %v138 = vadd.s32 %v136, %v137
    %v139 = vsel %vm115, 1, 0
    %v140 = vsel %vm116, 1, 0
    %v141 = vsel %vm79, %v139, 0
    %v142 = vsel %vm79, %v140, 0
    %v143 = vadd.s32 %v141, %v142
    %v144 = vrot.slane %v143, 4
    %v145 = vadd.s32 %v143, %v144
    %v146 = vrot.slane %v145, 2
    %v147 = vadd.s32 %v145, %v146
    %v148 = vrot.slane %v147, 1
    %v149 = vadd.s32 %v147, %v148
    %vm150 = vcmp.eq.s32.totalorder %v67, 3
    %vm151 = vcmp.eq.s32.totalorder %v68, 3
    %vm152 = vcmp.eq.s32.totalorder %v69, 3
    %vm153 = vcmp.eq.s32.totalorder %v70, 3
    %vm154 = vmand %vm150, %vm152
    %vm155 = vmand %vm151, %vm153
    %v156 = vsel %vm150, 1, 0
    %v157 = vsel %vm151, 1, 0
    %v158 = vsel %vm79, %v156, 0
    %v159 = vsel %vm79, %v157, 0
    %v160 = vadd.s32 %v158, %v159
    %v161 = vrot.slane %v160, 4
    %v162 = vadd.s32 %v160, %v161
    %v163 = vrot.slane %v162, 2
    %v164 = vadd.s32 %v162, %v163
    %v165 = vrot.slane %v164, 1
    %v166 = vadd.s32 %v164, %v165
    %v167 = vsel %vm152, 1, 0
    %v168 = vsel %vm153, 1, 0
    %v169 = vsel %vm79, %v167, 0
    %v170 = vsel %vm79, %v168, 0
    %v171 = vadd.s32 %v169, %v170
    %v172 = vrot.slane %v171, 4
    %v173 = vadd.s32 %v171, %v172
    %v174 = vrot.slane %v173, 2
    %v175 = vadd.s32 %v173, %v174
    %v176 = vrot.slane %v175, 1
    %v177 = vadd.s32 %v175, %v176
    %v178 = vsel %vm154, 1, 0
    %v179 = vsel %vm155, 1, 0
    %v180 = vsel %vm79, %v178, 0
    %v181 = vsel %vm79, %v179, 0
    %v182 = vadd.s32 %v180, %v181
    %v183 = vrot.slane %v182, 4
    %v184 = vadd.s32 %v182, %v183
    %v185 = vrot.slane %v184, 2
    %v186 = vadd.s32 %v184, %v185
    %v187 = vrot.slane %v186, 1
    %v188 = vadd.s32 %v186, %v187
    %vm189 = vcmask 1040384
    %v190 = vsel %vm189, %v88, %v99
    %vm191 = vcmask 1041408
    %v192 = vsel %vm191, %v190, %v110
    %vm193 = vcmask 1042432
    %v194 = vsel %vm193, %v192, %v127
    %vm195 = vcmask 1043456
    %v196 = vsel %vm195, %v194, %v138
    %vm197 = vcmask 1044480
    %v198 = vsel %vm197, %v196, %v149
    %vm199 = vcmask 1045504
    %v200 = vsel %vm199, %v198, %v166
    %vm201 = vcmask 1046528
    %v202 = vsel %vm201, %v200, %v177
    %v203 = vsel %vm189, %v188, 0
    %v204 = vld [vmem:[#allocation7] sm:$0xff]
    %v205 = vld [vmem:[#allocation7 + $0x8] sm:$0xff]
    %v206 = vadd.s32 %v204, %v202
    %v207 = vadd.s32 %v205, %v203
    %208 = vst.msk [vmem:[#allocation7] sm:$0xff] %vm79, %v206
    %209 = vst.msk [vmem:[#allocation7 + $0x8] sm:$0xff] %vm79, %v207
    // Predicated region
    $region22: #{tpu_custom_call.1} parent=1 // pred_check
      _
    $region23: #{tpu_custom_call.1} parent=1 // pred_check_branch
      %211 = sbr.rel (0) target = $region25
    $region24: #{tpu_custom_call.1} parent=1 // pred_region
      %s213 = ssub.s32 256, 256
      %214 = vsyncadd [#allocation4], %s213
      %s215 = sshll.u32 [#allocation7], 4
      %s216 = int_to_ptr.vmem [resolvable:$true] %s215
      %221 = dma.vmem_to_hbm [thread:$0]  %s216, 256, %s2, [#allocation4], 128, 128, 8
    $region25: #{tpu_custom_call.1} parent=1 // pred_fallthru
      _
    // Predicated region
    $region26: #{tpu_custom_call.1} parent=1 // pred_check
      _
    $region27: #{tpu_custom_call.1} parent=1 // pred_check_branch
      %223 = sbr.rel (0) target = $region29
    $region28: #{tpu_custom_call.1} parent=1 // pred_region
      %224 = dma.done [#allocation4], 256
    $region29: #{tpu_custom_call.1} parent=1 // pred_fallthru
      _
    %225 = vsyncpa [#allocation3], 1
    %226 = vsyncpa [#allocation6], 1
    %227 = vsyncpa [#allocation4], 1

</llo_original>
